<compile_context>
chip_gen: v7x
topology: tpu7x:2x2x1
jax: 0.10.0
libtpu: 0.0.40
codegen_flags: <defaults>
</compile_context>

<pallas_src>
import math

import jax
import jax.numpy as jnp
from jax.experimental import pallas as pl
from jax.experimental.pallas import tpu as pltpu

NGF = 8         # original: 64
IMG = 256       # original: 256 (hard-coded feature pyramid)


def _round_up(x, m):
    return (x + m - 1) // m * m


def _choose_tn(n):
    """Largest lane-block that divides the spatial axis (full dim as fallback)."""
    for t in (2048, 1024, 512, 256, 128):
        if n % t == 0:
            return t
    return n


# -----------------------------------------------------------------------------
# Pallas kernel 1: conv-as-GEMM with fused bias + activation epilogue
#   out[b] = act( A(M,K) @ B[b](K,N) + bias )      (bf16 operands, f32 acc)
# -----------------------------------------------------------------------------
def _gemm_kernel(act):
    def kern(a_ref, b_ref, bias_ref, o_ref):
        acc = jnp.dot(a_ref[...], b_ref[...], preferred_element_type=jnp.float32)
        acc = acc + bias_ref[...]
        if act == 'leaky':
            acc = jnp.where(acc >= 0, acc, 0.2 * acc)
        elif act == 'relu':
            acc = jnp.maximum(acc, 0.0)
        elif act == 'tanh':
            acc = jnp.tanh(acc)
        o_ref[...] = acc.astype(o_ref.dtype)
    return kern


def pallas_conv_gemm(A, B, bias=None, act='none'):
    """A:(M,K)  B:(nb,K,N)  ->  (nb,M,N) float32.

    N (the big spatial axis) is the lane axis -> lane-dense streaming & stores.
    M and K use full-dim blocks, so neither operand is zero-padded/copied
    (M is only padded to a multiple of 8 when Cout is tiny, e.g. 3).
    """
    M, K = A.shape
    nb, K2, N = B.shape
    assert K == K2
    Mp = _round_up(M, 8)
    A16 = A.astype(jnp.bfloat16)
    if Mp != M:
        A16 = jnp.zeros((Mp, K), jnp.bfloat16).at[:M].set(A16)
    B16 = B.astype(jnp.bfloat16)
    bias_f = jnp.zeros((Mp,), jnp.float32)
    if bias is not None:
        bias_f = bias_f.at[:M].set(bias.astype(jnp.float32))
    bias2d = bias_f.reshape(Mp, 1)

    tn = _choose_tn(N)
    grid = (nb, N // tn)
    out = pl.pallas_call(
        _gemm_kernel(act),
        out_shape=jax.ShapeDtypeStruct((nb, Mp, N), jnp.float32),
        grid_spec=pltpu.PrefetchScalarGridSpec(
            num_scalar_prefetch=0,
            grid=grid,
            in_specs=[pl.BlockSpec((Mp, K), lambda b, j: (0, 0)),
                      pl.BlockSpec((None, K, tn), lambda b, j: (b, 0, j)),
                      pl.BlockSpec((Mp, 1), lambda b, j: (0, 0))],
            out_specs=pl.BlockSpec((None, Mp, tn), lambda b, j: (b, 0, j))),
        compiler_params=pltpu.CompilerParams(
            dimension_semantics=("parallel", "parallel")),
    )(A16, B16, bias2d)
    if Mp != M:
        out = out[:, :M, :]
    return out


# -----------------------------------------------------------------------------
# Pallas kernel 2: InstanceNorm (+ optional fused activation) over (N*C, H*W)
# -----------------------------------------------------------------------------
def _make_in_kernel(act, neg_slope, eps):
    def kern(x_ref, g_ref, b_ref, o_ref):
        x = x_ref[...]
        mean = jnp.mean(x, axis=-1, keepdims=True)
        xc = x - mean
        var = jnp.mean(xc * xc, axis=-1, keepdims=True)
        y = xc * jax.lax.rsqrt(var + eps)
        y = y * g_ref[...] + b_ref[...]
        if act == 'leaky':
            y = jnp.where(y >= 0, y, y * neg_slope)
        elif act == 'relu':
            y = jnp.maximum(y, 0.0)
        o_ref[...] = y
    return kern


def instance_norm_act(x, gamma=None, beta=None, act='none',
                      neg_slope=0.2, eps=1e-5):
    n, c, h, w = x.shape
    L = h * w
    xf = x.astype(jnp.float32)
    if L < 128:
        # 4x4 / 8x8 pyramid levels: a Pallas launch + masked <128-lane stores
        # would dwarf the math -- plain XLA path.
        mean = jnp.mean(xf, axis=(2, 3), keepdims=True)
        xc = xf - mean
        var = jnp.mean(xc * xc, axis=(2, 3), keepdims=True)
        y = xc * jax.lax.rsqrt(var + eps)
        if gamma is not None:
            y = y * gamma[None, :, None, None] + beta[None, :, None, None]
        if act == 'leaky':
            y = jnp.where(y >= 0, y, y * neg_slope)
        elif act == 'relu':
            y = jnp.maximum(y, 0.0)
        return y

    R = n * c
    xr = xf.reshape(R, L)
    g = jnp.ones((n, c), jnp.float32) if gamma is None \
        else jnp.broadcast_to(gamma[None, :], (n, c))
    bt = jnp.zeros((n, c), jnp.float32) if beta is None \
        else jnp.broadcast_to(beta[None, :], (n, c))
    Rp = _round_up(R, 8)
    # adaptive row block (32/16/8), capped by a conservative VMEM budget
    rb = 32 if Rp % 32 == 0 else (16 if Rp % 16 == 0 else 8)
    while rb > 8 and rb * L * 4 > (4 << 20):
        rb //= 2
    # TODO(synk): a two-pass L-tiled variant would pipeline better on v7x when
    #             n*c is tiny; at these sizes the IN cost is negligible vs convs.
    xr_p = xr if Rp == R else jnp.zeros((Rp, L), jnp.float32).at[:R].set(xr)
    g_p = jnp.zeros((Rp, 1), jnp.float32).at[:R].set(g.reshape(R, 1))
    b_p = jnp.zeros((Rp, 1), jnp.float32).at[:R].set(bt.reshape(R, 1))

    out = pl.pallas_call(
        _make_in_kernel(act, neg_slope, eps),
        out_shape=jax.ShapeDtypeStruct((Rp, L), jnp.float32),
        grid_spec=pltpu.PrefetchScalarGridSpec(
            num_scalar_prefetch=0,
            grid=(Rp // rb,),
            in_specs=[pl.BlockSpec((rb, L), lambda i: (i, 0)),
                      pl.BlockSpec((rb, 1), lambda i: (i, 0)),
                      pl.BlockSpec((rb, 1), lambda i: (i, 0))],
            out_specs=pl.BlockSpec((rb, L), lambda i: (i, 0))),
        compiler_params=pltpu.CompilerParams(
            dimension_semantics=("parallel",)),
    )(xr_p, g_p, b_p)
    return out[:R].reshape(n, c, h, w)


# -----------------------------------------------------------------------------
# Conv glue (transpose-free im2col -> Pallas GEMM)
# -----------------------------------------------------------------------------
def leaky(x, s=0.2):
    return jnp.where(x >= 0, x, s * x)


def _im2col_nchw(x, kh, kw, stride, dilation):
    """x:(N,Cin,Hp,Wp) (already padded) -> patches:(N, Cin*kh*kw, Ho*Wo).

    K ordering is (cin, kh, kw); built with strided slices + stack only, so no
    HBM transpose of the patch matrix is ever materialised."""
    n, cin, hp, wp = x.shape
    ho = (hp - dilation * (kh - 1) - 1) // stride + 1
    wo = (wp - dilation * (kw - 1) - 1) // stride + 1
    cols = []
    for i in range(kh):
        for j in range(kw):
            cols.append(x[:, :,
                          i * dilation:i * dilation + (ho - 1) * stride + 1:stride,
                          j * dilation:j * dilation + (wo - 1) * stride + 1:stride])
    pat = jnp.stack(cols, axis=2)                       # (n, cin, kh*kw, ho, wo)
    return pat.reshape(n, cin * kh * kw, ho * wo), ho, wo


def conv2d(x, w, b=None, stride=1, padding=0, dilation=1, act='none'):
    """x:(N,Cin,H,W)  w:(Cout,Cin,kh,kw)  -> (N,Cout,Ho,Wo) float32."""
    n, cin, _, _ = x.shape
    cout, cin2, kh, kw = w.shape
    assert cin == cin2
    x = x.astype(jnp.bfloat16)      # bf16 im2col: half the HBM traffic
    if padding > 0:
        x = jnp.pad(x, ((0, 0), (0, 0), (padding, padding), (padding, padding)))
    patches, ho, wo = _im2col_nchw(x, kh, kw, stride, dilation)
    W2d = w.reshape(cout, cin * kh * kw)
    out = pallas_conv_gemm(W2d, patches, b, act=act)    # (n, cout, ho*wo)
    return out.reshape(n, cout, ho, wo)


def conv_transpose2d(x, w_t, b=None, stride=2, padding=1, act='none'):
    """PyTorch ConvTranspose2d(k=4,s=2,p=1), w_t:(Cin,Cout,4,4).

    Lowered as 4 sub-pixel convolutions fused into one 3x3 conv producing
    4*Cout channels, followed by a pixel shuffle (no zero-dilated input)."""
    n, cin, h, w = x.shape
    cin2, cout, k, _ = w_t.shape
    assert cin == cin2 and k == 4 and stride == 2 and padding == 1
    w_eq = jnp.flip(jnp.transpose(w_t, (1, 0, 2, 3)), axis=(2, 3))  # (cout,cin,4,4)
    w3 = jnp.zeros((4, cout, cin, 3, 3), w_eq.dtype)
    # parity (r, s) -> slot r*2+s ; taps derived from the zero-dilated equivalence
    w3 = w3.at[0, :, :, 0, 0].set(w_eq[:, :, 0, 0])   # even-even
    w3 = w3.at[0, :, :, 0, 1].set(w_eq[:, :, 0, 2])
    w3 = w3.at[0, :, :, 1, 0].set(w_eq[:, :, 2, 0])
    w3 = w3.at[0, :, :, 1, 1].set(w_eq[:, :, 2, 2])
    w3 = w3.at[1, :, :, 0, 1].set(w_eq[:, :, 0, 1])   # even-odd
    w3 = w3.at[1, :, :, 0, 2].set(w_eq[:, :, 0, 3])
    w3 = w3.at[1, :, :, 1, 1].set(w_eq[:, :, 2, 1])
    w3 = w3.at[1, :, :, 1, 2].set(w_eq[:, :, 2, 3])
    w3 = w3.at[2, :, :, 1, 0].set(w_eq[:, :, 1, 0])   # odd-even
    w3 = w3.at[2, :, :, 1, 1].set(w_eq[:, :, 1, 2])
    w3 = w3.at[2, :, :, 2, 0].set(w_eq[:, :, 3, 0])
    w3 = w3.at[2, :, :, 2, 1].set(w_eq[:, :, 3, 2])
    w3 = w3.at[3, :, :, 1, 1].set(w_eq[:, :, 1, 1])   # odd-odd
    w3 = w3.at[3, :, :, 1, 2].set(w_eq[:, :, 1, 3])
    w3 = w3.at[3, :, :, 2, 1].set(w_eq[:, :, 3, 1])
    w3 = w3.at[3, :, :, 2, 2].set(w_eq[:, :, 3, 3])
    w3 = w3.reshape(4 * cout, cin, 3, 3)
    b4 = None if b is None else jnp.tile(b, 4)
    y = conv2d(x, w3, b4, stride=1, padding=1, act=act)   # (n, 4*cout, h, w)
    y = y.reshape(n, 2, 2, cout, h, w)
    y = jnp.transpose(y, (0, 3, 4, 1, 5, 2))               # (n,cout,h,2,w,2)
    return y.reshape(n, cout, 2 * h, 2 * w)


def window_sum_2d(m, k, pad):
    """m:(N,1,H,W) -> k x k windowed sum with 'same' padding (plain XLA)."""
    mp = jnp.pad(m, ((0, 0), (0, 0), (pad, pad), (pad, pad)))
    ho = mp.shape[2] - k + 1
    wo = mp.shape[3] - k + 1
    s = jnp.zeros((m.shape[0], 1, ho, wo), jnp.float32)
    for i in range(k):
        for j in range(k):
            s = s + mp[:, :, i:i + ho, j:j + wo]
    return s


# -----------------------------------------------------------------------------
# Parameter init (deterministic, xavier-normal-ish as in initialize_weights)
# -----------------------------------------------------------------------------
class Rng:
    def __init__(self, seed=0):
        self._key = jax.random.PRNGKey(seed)

    def next(self):
        self._key, sub = jax.random.split(self._key)
        return sub


def xavier(rng, shape, fan_in, fan_out):
    std = math.sqrt(2.0 / (fan_in + fan_out))
    return jax.random.normal(rng.next(), shape, jnp.float32) * std


def init_conv(rng, cin, cout, k, bias=True):
    p = {'w': xavier(rng, (cout, cin, k, k), cin * k * k, cout * k * k)}
    p['b'] = jnp.zeros((cout,), jnp.float32) if bias else None
    return p


def init_convT(rng, cin, cout, k=4, bias=True):
    return {'w': xavier(rng, (cin, cout, k, k), cin * k * k, cout * k * k),
            'b': jnp.zeros((cout,), jnp.float32) if bias else None}


def init_unet_e(rng, outer_nc, inner_nc, mid):
    d = {'conv': init_conv(rng, outer_nc, inner_nc, 4, True)}
    if mid:
        d['gamma'] = jnp.ones((inner_nc,), jnp.float32)
        d['beta'] = jnp.zeros((inner_nc,), jnp.float32)
    return d


def init_resblock(rng, dim):
    return {'c1': init_conv(rng, dim, dim, 3, True),
            'c2': init_conv(rng, dim, dim, 3, True)}


def init_encoder(rng, input_nc, ngf):
    return {'e1': init_unet_e(rng, input_nc, ngf, False),
            'e2': init_unet_e(rng, ngf, ngf * 2, True),
            'e3': init_unet_e(rng, ngf * 2, ngf * 4, True),
            'e4': init_unet_e(rng, ngf * 4, ngf * 8, True),
            'e5': init_unet_e(rng, ngf * 8, ngf * 8, True),
            'e6': init_unet_e(rng, ngf * 8, ngf * 8, False),
            'middle': [init_resblock(rng, ngf * 8) for _ in range(4)]}


def init_unet_d(rng, inner_nc, outer_nc, outermost):
    d = {'conv': init_convT(rng, inner_nc, outer_nc, 4, True)}
    if not outermost:
        d['gamma'] = jnp.ones((outer_nc,), jnp.float32)
        d['beta'] = jnp.zeros((outer_nc,), jnp.float32)
    return d


def init_decoder(rng, output_nc, ngf):
    return {'d1': init_unet_d(rng, ngf * 8, ngf * 8, False),
            'd2': init_unet_d(rng, ngf * 16, ngf * 8, False),
            'd3': init_unet_d(rng, ngf * 16, ngf * 4, False),
            'd4': init_unet_d(rng, ngf * 8, ngf * 2, False),
            'd5': init_unet_d(rng, ngf * 4, ngf, False),
            'd6': init_unet_d(rng, ngf * 2, output_nc, True)}


def init_conv_stack(rng, specs):
    # specs: (cin, cout, k, stride, pad, act); conv bias=False, IN non-affine
    return [{'w': xavier(rng, (cout, cin, k, k), cin * k * k, cout * k * k),
             'stride': s, 'pad': pd, 'act': act}
            for (cin, cout, k, s, pd, act) in specs]


def init_convup(rng, cin, cout):
    return {'w': xavier(rng, (cout, cin, 1, 1), cin, cout)}


def init_pcb(rng, cin, cout, k):
    return {'w': xavier(rng, (cout, cin, k, k), cin * k * k, cout * k * k),
            'gamma': jnp.ones((cout,), jnp.float32),
            'beta': jnp.zeros((cout,), jnp.float32),
            'k': k, 'pad': k // 2}


def gaussian_weights(h, w, v=1.5):
    ys, xs = jnp.meshgrid(jnp.arange(h, dtype=jnp.float32),
                          jnp.arange(w, dtype=jnp.float32), indexing='ij')
    yf, xf = ys.ravel(), xs.ravel()
    d2 = (yf[:, None] - yf[None, :]) ** 2 + (xf[:, None] - xf[None, :]) ** 2
    g = jnp.exp(-d2 / (2.0 * v * v))
    g = g / jnp.sum(g, axis=1, keepdims=True)
    return g.reshape(h * w, h, w)


def init_base(rng, c, size):
    hidden = max(c // 16, 1)
    return {'se_w1': xavier(rng, (hidden, c), c, hidden),
            'se_b1': jnp.zeros((hidden,), jnp.float32),
            'se_w2': xavier(rng, (c, hidden), hidden, c),
            'se_b2': jnp.zeros((c,), jnp.float32),
            'down': init_conv(rng, 2 * c, c, 1, True),
            'gus': gaussian_weights(size, size, 1.5)}


def init_pcconv(rng, ngf, size32):
    p = {}
    p['down_128'] = init_conv_stack(rng, [(ngf, 2 * ngf, 4, 2, 1, 'leaky'),
                                          (2 * ngf, 4 * ngf, 4, 2, 1, 'leaky')])
    p['down_64'] = init_conv_stack(rng, [(2 * ngf, 4 * ngf, 4, 2, 1, 'leaky')])
    p['down_32'] = init_conv_stack(rng, [(4 * ngf, 4 * ngf, 1, 1, 0, 'leaky')])
    p['down_16'] = init_conv_stack(rng, [(8 * ngf, 8 * ngf, 4, 2, 1, 'none')])
    p['down_8'] = init_conv_stack(rng, [(8 * ngf, 8 * ngf, 4, 2, 1, 'leaky'),
                                        (8 * ngf, 8 * ngf, 4, 2, 1, 'none')])
    p['down_4'] = init_conv_stack(rng, [(8 * ngf, 8 * ngf, 4, 2, 1, 'leaky'),
                                        (8 * ngf, 8 * ngf, 4, 2, 1, 'leaky'),
                                        (8 * ngf, 8 * ngf, 4, 2, 1, 'leaky')])
    p['down'] = init_conv_stack(rng, [(12 * ngf, 4 * ngf, 1, 1, 0, 'leaky')])
    p['fuse'] = init_conv_stack(rng, [(8 * ngf, 8 * ngf, 1, 1, 0, 'leaky')])
    p['up'] = init_convup(rng, 8 * ngf, 4 * ngf)
    p['up_128'] = init_convup(rng, 8 * ngf, ngf)
    p['up_64'] = init_convup(rng, 8 * ngf, 2 * ngf)
    p['up_32'] = init_convup(rng, 8 * ngf, 4 * ngf)
    p['cov_3'] = [init_pcb(rng, 4 * ngf, 4 * ngf, 3) for _ in range(5)]
    p['cov_5'] = [init_pcb(rng, 4 * ngf, 4 * ngf, 5) for _ in range(5)]
    p['cov_7'] = [init_pcb(rng, 4 * ngf, 4 * ngf, 7) for _ in range(5)]
    p['base'] = init_base(rng, 8 * ngf, size32)
    return p


def init_inpaintor(rng, ngf=NGF, img_size=IMG):
    return {'ngf': ngf, 'img_size': img_size,
            'encoder': init_encoder(rng, 6, ngf),
            'pc': init_pcconv(rng, ngf, img_size // 8),
            'innercos': init_conv(rng, 4 * ngf, 3, 1, True),
            'decoder': init_decoder(rng, 3, ngf)}


# -----------------------------------------------------------------------------
# Module forward functions
# -----------------------------------------------------------------------------
def unet_e_apply(p, x, mode):
    if mode == 'outer':
        return conv2d(x, p['conv']['w'], p['conv']['b'], 2, 1)
    x = leaky(x, 0.2)
    y = conv2d(x, p['conv']['w'], p['conv']['b'], 2, 1)
    if mode == 'mid':
        y = instance_norm_act(y, p['gamma'], p['beta'], act='none')
    return y


def resblock_apply(p, x, dilation=2):
    h = jnp.pad(x, ((0, 0), (0, 0), (dilation, dilation), (dilation, dilation)),
                mode='reflect')
    h = conv2d(h, p['c1']['w'], p['c1']['b'], 1, 0, dilation=dilation)
    h = instance_norm_act(h, act='relu')
    h = jnp.pad(h, ((0, 0), (0, 0), (1, 1), (1, 1)), mode='reflect')
    h = conv2d(h, p['c2']['w'], p['c2']['b'], 1, 0, 1)
    h = instance_norm_act(h, act='none')
    return x + h


def encoder_apply(p, x):
    y1 = unet_e_apply(p['e1'], x, 'outer')
    y2 = unet_e_apply(p['e2'], y1, 'mid')
    y3 = unet_e_apply(p['e3'], y2, 'mid')
    y4 = unet_e_apply(p['e4'], y3, 'mid')
    y5 = unet_e_apply(p['e5'], y4, 'mid')
    y6 = unet_e_apply(p['e6'], y5, 'inner')
    y7 = y6
    for rb in p['middle']:
        y7 = resblock_apply(rb, y7, dilation=2)
    return (y1, y2, y3, y4, y5, y7)


def unet_d_apply(p, x, outermost):
    x = jnp.maximum(x, 0.0)
    if outermost:
        return conv_transpose2d(x, p['conv']['w'], p['conv']['b'], act='tanh')
    y = conv_transpose2d(x, p['conv']['w'], p['conv']['b'])
    return instance_norm_act(y, p['gamma'], p['beta'], act='none')


def decoder_apply(p, i1, i2, i3, i4, i5, i6):
    y1 = unet_d_apply(p['d1'], i6, False)
    y2 = unet_d_apply(p['d2'], jnp.concatenate([y1, i5], 1), False)
    y3 = unet_d_apply(p['d3'], jnp.concatenate([y2, i4], 1), False)
    y4 = unet_d_apply(p['d4'], jnp.concatenate([y3, i3], 1), False)
    y5 = unet_d_apply(p['d5'], jnp.concatenate([y4, i2], 1), False)
    y6 = unet_d_apply(p['d6'], jnp.concatenate([y5, i1], 1), True)
    return y6


def conv_stack_apply(layers, x):
    for L in layers:
        x = conv2d(x, L['w'], None, stride=L['stride'], padding=L['pad'])
        x = instance_norm_act(x, act=L['act'])
    return x


def convup_apply(p, x, size):
    n, c, _, _ = x.shape
    x = jax.image.resize(x, (n, c, size[0], size[1]), method='bilinear')
    x = conv2d(x, p['w'], None, 1, 0)
    return instance_norm_act(x, act='leaky')


def partial_conv(feat, mask, w, pad):
    # Mask channels are identical, so the mask-normalisation conv with an
    # all-ones kernel reduces to cin * (single-channel windowed sum).
    cout, cin, k, _ = w.shape
    m1 = mask[:, :1].astype(jnp.float32)
    out = conv2d(feat * m1, w, None, stride=1, padding=pad)
    out_mask = cin * window_sum_2d(m1, k, pad)
    holes = out_mask == 0
    mask_sum = jnp.where(holes, 1.0, out_mask)
    out = jnp.where(holes, 0.0, out / mask_sum)
    new_mask = jnp.where(holes, 0.0, 1.0)
    return out, new_mask


def pcbactiv_apply(p, feat, mask):
    out, new_mask = partial_conv(feat, mask, p['w'], p['pad'])
    out = instance_norm_act(out, p['gamma'], p['beta'], act='leaky')
    return out, new_mask


def run_cov(cov_params, feat, mask):
    f, m = feat, mask
    for layer in cov_params:
        f, m = pcbactiv_apply(layer, f, m)
    return f


def extract_patches(x_chw, k):
    C, H, W = x_chw.shape
    Ho, Wo = H - k + 1, W - k + 1
    cols = [x_chw[:, di:di + Ho, dj:dj + Wo] for di in range(k) for dj in range(k)]
    pat = jnp.stack(cols, axis=0).reshape(k, k, C, Ho, Wo)
    return jnp.transpose(pat, (3, 4, 2, 0, 1)).reshape(Ho * Wo, C, k, k)


def base_apply(p, x):
    n, c, h, w = x.shape
    hw = h * w
    # SELayer (tiny c x c/16 linears: plain XLA, not worth a Pallas launch)
    y = jnp.mean(x, axis=(2, 3))                                # (n, c)
    y = jnp.maximum(y @ p['se_w1'].T + p['se_b1'], 0.0)
    y = jax.nn.sigmoid(y @ p['se_w2'].T + p['se_b2'])
    out32 = x * y[:, :, None, None]
    # Gaussian-weighted pooling branch (hw x hw GEMM on the MXU)
    gus2d = p['gus'].reshape(hw, hw)
    xt = out32[0].reshape(c, hw).T                              # (hw, c)
    gus_out = pallas_conv_gemm(gus2d, xt[None], None)[0]        # (hw, c)
    gus_out = gus_out.reshape(n, c, h, w)   # same reinterpretation as reference
    # contextual self-attention branch
    csa2_in = jax.nn.sigmoid(out32)
    csa2_f_p = jnp.pad(csa2_in, ((0, 0), (0, 0), (1, 1), (1, 1)))
    csa2_ff_p = jnp.pad(out32, ((0, 0), (0, 0), (1, 1), (1, 1)))
    csa2_fff = extract_patches(csa2_ff_p[0], 3)                 # (hw, c, 3, 3)
    csa2_f = extract_patches(csa2_f_p[0], 3)                    # (hw, c, 3, 3)
    csa2_conv = extract_patches(csa2_in[0], 1)                  # (hw, c, 1, 1)
    csa_a = jnp.mean(csa2_conv * csa2_f, axis=1)                # (hw, 3, 3)
    csa_a = jax.nn.softmax(csa_a.reshape(hw, 9), axis=1).reshape(hw, 1, 3, 3)
    out_csa = jnp.sum(csa_a * csa2_fff, axis=(2, 3)).reshape(n, c, h, w)
    cat = jnp.concatenate([gus_out, out_csa], axis=1)
    return conv2d(cat, p['down']['w'], p['down']['b'], 1, 0, act='leaky')


def pcconv_apply(p, inputs, mask):
    s32 = mask.shape[2]
    xs = [leaky(t, 0.2) for t in inputs]
    x1 = conv_stack_apply(p['down_128'], xs[0])
    x2 = conv_stack_apply(p['down_64'], xs[1])
    x3 = conv_stack_apply(p['down_32'], xs[2])
    x4 = convup_apply(p['up'], xs[3], (s32, s32))
    x5 = convup_apply(p['up'], xs[4], (s32, s32))
    x6 = convup_apply(p['up'], xs[5], (s32, s32))
    x_DE = conv_stack_apply(p['down'], jnp.concatenate([x1, x2, x3], 1))
    x_ST = conv_stack_apply(p['down'], jnp.concatenate([x4, x5, x6], 1))

    x_DE_fi = conv_stack_apply(p['down'], jnp.concatenate(
        [run_cov(p['cov_3'], x_DE, mask),
         run_cov(p['cov_5'], x_DE, mask),
         run_cov(p['cov_7'], x_DE, mask)], 1))
    x_ST_fi = conv_stack_apply(p['down'], jnp.concatenate(
        [run_cov(p['cov_3'], x_ST, mask),
         run_cov(p['cov_5'], x_ST, mask),
         run_cov(p['cov_7'], x_ST, mask)], 1))

    x_cat_fuse = conv_stack_apply(p['fuse'], jnp.concatenate([x_ST_fi, x_DE_fi], 1))
    x_final = base_apply(p['base'], x_cat_fuse)

    x1o = convup_apply(p['up_128'], x_final, (4 * s32, 4 * s32)) + inputs[0]
    x2o = convup_apply(p['up_64'], x_final, (2 * s32, 2 * s32)) + inputs[1]
    x3o = convup_apply(p['up_32'], x_final, (s32, s32)) + inputs[2]
    x4o = conv_stack_apply(p['down_16'], x_final) + inputs[3]
    x5o = conv_stack_apply(p['down_8'], x_final) + inputs[4]
    x6o = conv_stack_apply(p['down_4'], x_final) + inputs[5]
    return [x1o, x2o, x3o, x4o, x5o, x6o], [x_ST_fi, x_DE_fi]


def inner_cos_apply(p, t0, t1):
    o0 = conv2d(t0, p['w'], p['b'], 1, 0, act='tanh')   # tanh fused in epilogue
    o1 = conv2d(t1, p['w'], p['b'], 1, 0, act='tanh')
    return (o0, o1)


# -----------------------------------------------------------------------------
# Inpaintor preprocessing + forward (training-mode path)
# -----------------------------------------------------------------------------
def getmask(alpha, size, channel, thr=0.1):
    n = alpha.shape[0]
    a = jax.image.resize(alpha, (n, alpha.shape[1], size, size), method='bilinear')
    m = (a[:, 0, :, :] > thr).astype(jnp.float32)
    return jnp.broadcast_to(m[:, None, :, :], (n, channel, size, size))


def get_hole_image(img, mask_256, mask_32):
    hole = mask_256[:, 0:1] > 0.5
    fill = [2 * 123.0 / 255.0 - 1.0, 2 * 104.0 / 255.0 - 1.0, 2 * 117.0 / 255.0 - 1.0]
    chans = [jnp.where(hole, fill[i], img[:, i:i + 1]) for i in range(3)]
    img = jnp.concatenate(chans, 1)
    mask_32 = 1.0 - mask_32
    mask_256 = 1.0 - mask_256
    inp = jnp.concatenate([img, mask_256], 1)
    return inp, mask_32


def inpaintor_forward(params, img, alpha):
    S, ngf = params['img_size'], params['ngf']
    img = jax.image.resize(img, (img.shape[0], 3, S, S), method='bilinear')
    mask_256 = getmask(alpha, S, 3)
    mask_32 = getmask(alpha, S // 8, 4 * ngf)
    inp, mask_32 = get_hole_image(img, mask_256, mask_32)

    feats = encoder_apply(params['encoder'], inp)
    x_out, loss_feats = pcconv_apply(params['pc'], list(feats), mask_32)
    de_out = inner_cos_apply(params['innercos'], loss_feats[0], loss_feats[1])
    out = decoder_apply(params['decoder'], *x_out)
    return out, de_out


# -----------------------------------------------------------------------------
if __name__ == "__main__":
    key = jax.random.PRNGKey(0)
    k_img, k_alpha = jax.random.split(key)
    img = jax.random.normal(k_img, (1, 3, 64, 64), jnp.float32)       # RGB-ish
    alpha = jax.random.uniform(k_alpha, (1, 3, 64, 64), jnp.float32)  # alpha matte

    params = init_inpaintor(Rng(0), ngf=NGF, img_size=IMG)
    out, de_out = inpaintor_forward(params, img, alpha)
    out = jax.block_until_ready(out)
    jax.block_until_ready(de_out)

    assert out.shape == (1, 3, IMG, IMG)
    assert de_out[0].shape == (1, 3, IMG // 8, IMG // 8)
    assert bool(jnp.all(jnp.isfinite(out)))
    print("KERNEL_OK")
</pallas_src>

<mosaic_0001>
module attributes {stable_mosaic.version = 11 : i64} {
  func.func @kern(%arg0: i32, %arg1: i32, %arg2: memref<8x96xbf16, #tpu.memory_space<vmem>>, %arg3: memref<1x96x2048xbf16, #tpu.memory_space<vmem>>, %arg4: memref<8x1xf32, #tpu.memory_space<vmem>>, %arg5: memref<1x8x2048xf32, #tpu.memory_space<vmem>>) attributes {dimension_semantics = [#tpu.dimension_semantics<parallel>, #tpu.dimension_semantics<parallel>], iteration_bounds = array<i64: 1, 8>, scalar_prefetch = 0 : i64, scratch_operands = 0 : i64, tpu.core_type = #tpu.core_type<tc>, window_params = [{pipeline_mode = #tpu.pipeline_mode<synchronous>, transform_indices = @transform_0, window_bounds = array<i64: 8, 96>}, {transform_indices = @transform_1, window_bounds = array<i64: 1, 96, 2048>}, {pipeline_mode = #tpu.pipeline_mode<synchronous>, transform_indices = @transform_2, window_bounds = array<i64: 8, 1>}, {transform_indices = @transform_3, window_bounds = array<i64: 1, 8, 2048>}]} {
    %c0 = arith.constant 0 : index
    %c0_0 = arith.constant 0 : index
    %0 = vector.load %arg2[%c0, %c0_0] : memref<8x96xbf16, #tpu.memory_space<vmem>>, vector<8x96xbf16>
    %c0_1 = arith.constant 0 : index
    %c0_2 = arith.constant 0 : index
    %c0_3 = arith.constant 0 : index
    %1 = vector.load %arg3[%c0_1, %c0_2, %c0_3] : memref<1x96x2048xbf16, #tpu.memory_space<vmem>>, vector<1x96x2048xbf16>
    %2 = vector.shape_cast %1 : vector<1x96x2048xbf16> to vector<96x2048xbf16>
    %cst = arith.constant dense<0.000000e+00> : vector<8x2048xf32>
    %3 = tpu.matmul %0, %2, %cst {dimension_numbers = #tpu.dot_dimension_numbers<[1], [0], [0], [1], [0, 0, 1, 1], [], []>} : vector<8x96xbf16>, vector<96x2048xbf16>, vector<8x2048xf32> -> vector<8x2048xf32>
    %c0_4 = arith.constant 0 : index
    %c0_5 = arith.constant 0 : index
    %4 = vector.load %arg4[%c0_4, %c0_5] : memref<8x1xf32, #tpu.memory_space<vmem>>, vector<8x1xf32>
    %5 = vector.broadcast %4 : vector<8x1xf32> to vector<8x2048xf32>
    %6 = arith.addf %3, %5 : vector<8x2048xf32>
    %c0_6 = arith.constant 0 : index
    %c0_7 = arith.constant 0 : index
    %c0_8 = arith.constant 0 : index
    %7 = vector.load %arg5[%c0_6, %c0_7, %c0_8] : memref<1x8x2048xf32, #tpu.memory_space<vmem>>, vector<1x8x2048xf32>
    %8 = vector.shape_cast %7 : vector<1x8x2048xf32> to vector<8x2048xf32>
    %9 = vector.shape_cast %6 : vector<8x2048xf32> to vector<1x8x2048xf32>
    tpu.vector_store %arg5[%c0_6, %c0_7, %c0_8], %9 {strides = array<i32>} : memref<1x8x2048xf32, #tpu.memory_space<vmem>>, vector<1x8x2048xf32>,
    return
  }
  func.func @transform_0(%arg0: i32, %arg1: i32) -> (i32, i32) {
    %c0_i32 = arith.constant 0 : i32
    %c0_i32_0 = arith.constant 0 : i32
    %c0_i32_1 = arith.constant 0 : i32
    return %c0_i32, %c0_i32_0 : i32, i32
  }
  func.func @transform_1(%arg0: i32, %arg1: i32) -> (i32, i32, i32) {
    %c0_i32 = arith.constant 0 : i32
    %c0_i32_0 = arith.constant 0 : i32
    return %arg0, %c0_i32, %arg1 : i32, i32, i32
  }
  func.func @transform_2(%arg0: i32, %arg1: i32) -> (i32, i32) {
    %c0_i32 = arith.constant 0 : i32
    %c0_i32_0 = arith.constant 0 : i32
    %c0_i32_1 = arith.constant 0 : i32
    return %c0_i32, %c0_i32_0 : i32, i32
  }
  func.func @transform_3(%arg0: i32, %arg1: i32) -> (i32, i32, i32) {
    %c0_i32 = arith.constant 0 : i32
    %c0_i32_0 = arith.constant 0 : i32
    return %arg0, %c0_i32, %arg1 : i32, i32, i32
  }
}

</mosaic_0001>

<llo_original>
// kernel: tpu_custom_call.1
$region0: #{tpu_custom_call.1}
  #allocation0 [shape = 'u32[]', space=smem, size = 0x4, offset = 0x4, fixed_abs, tag = 'smem constant byte address 0x4 - core index']
  #allocation1 [shape = 'u32[144,128]{1,0:T(1,128)}', space=vmem, size = 0x12000, scoped, tag = 'internal scratch']
  %s0 = inlined_call_operand.hbm [shape: bf16[8,96], index: 0, kind: input, shape index: {}]
  %s1 = inlined_call_operand.hbm [shape: bf16[1,96,16384], index: 1, kind: input, shape index: {}]
  %s2 = inlined_call_operand.vmem [shape: f32[8,1], index: 2, kind: input, shape index: {}]
  %s3 = inlined_call_operand.hbm [shape: f32[1,8,16384], index: 3, kind: output, shape index: {}]
  %s4 = sld [smem:[#allocation0]]
  $region53: #{tpu_custom_call.1} parent=0
    _
  %s6 = ssub.s32 1, %s4
  %s7 = scalar_select 0, %s6, %s4
  $region1: #{tpu_custom_call.1} parent=0
    #allocation2 [shape = 'u8[2048]{0}', space=vmem, size = 0x800, scoped, tag = 'input window, operand 0, single buffered']
    #allocation3 [shape = 's32[2]{0}', space=sflag, size = 0x8, scoped, tag = 'scoped memory for tpu_custom_call.1']
    #allocation4 [shape = 's32[2]{0}', space=sflag, size = 0x8, scoped, tag = 'scoped memory for tpu_custom_call.1']
    #allocation5 [shape = 'u8[786432]{0}', space=vmem, size = 0xc0000, scoped, tag = 'input window, operand 1']
    #allocation6 [shape = 's32[2]{0}', space=sflag, size = 0x8, scoped, tag = 'scoped memory for tpu_custom_call.1']
    #allocation7 [shape = 'u8[131072]{0}', space=vmem, size = 0x20000, scoped, tag = 'output window, operand 0']
    %8 = vsyncpa [#allocation3], 0
    %9 = vsyncpa [#allocation6], 0
    %s10 = scalar_lea.sflag [#allocation6], 1
    %11 = vsyncpa %s10, 0
    %12 = vsyncpa [#allocation4], 0
    %s13 = scalar_lea.sflag [#allocation4], 1
    %14 = vsyncpa %s13, 0
    loop: start=0, step=1, limit=10
    $region2: #{tpu_custom_call.1} parent=1 // loop_pre_header
      _
    $region3: #{tpu_custom_call.1} parent=1 // loop_header
      %s16 = sphi 0, %s20
      %p17 = scmp.ge.s32.totalorder %s16, 10
      %s23 = sphi 0, %s35
      %s24 = sphi 0, %s31
      %s25 = sphi 0, %s23
      %s26 = sphi 0, %s24
      %s27 = sphi 0, %s25
      %s28 = sphi 0, %s26
      %s36 = sphi 0, %s36
      %s38 = sphi 0, %s36
      %s39 = sphi 0, %s38
      %s53 = sphi 0, %s39
      %s61 = sphi 0, %s63
      %s64 = sphi 0, %s61
      %s65 = sphi 0, %s64
      %s81 = sphi 0, %s65
      %s85 = sphi 0, %s85
      %s87 = sphi 0, %s85
      %s88 = sphi 0, %s87
      %s102 = sphi 0, %s88
      %s110 = sphi 0, %s112
      %s113 = sphi 0, %s110
      %s114 = sphi 0, %s113
      %s130 = sphi 0, %s114
    $region4: #{tpu_custom_call.1} parent=1 // loop_header_branch
      %19 = sbr.rel (%p17) target = $region8
    $region5: #{tpu_custom_call.1} parent=1 // loop_body
      %s21 = ssub.s32 %s16, 1
      %s22 = ssub.s32 %s16, 2
      %s29 = sadd.s32 1, %s24
      %p30 = scmp.ge.s32.totalorder %s29, 8
      %s31 = scalar_select %p30, 0, %s29
      %s32 = sadd.s32 1, %s23
      %s33 = scalar_select %p30, %s32, %s23
      %p34 = scmp.ge.s32.totalorder %s33, 1
      %s35 = scalar_select %p34, 0, %s33
      %s37 = sadd.s32 %s36, 1
      %p40 = scmp.eq.s32.totalorder %s16, 7
      %p41 = scmp.ne.s32.totalorder %s36, %s38
      %p42 = scmp.eq.s32.totalorder %s16, 0
      %p43 = por %p41, %p42
      %p44 = scmp.ne.s32.totalorder %s36, %s38
      %p45 = scmp.eq.s32.totalorder %s21, 7
      %p46 = por %p44, %p45
      %p47 = scmp.ne.s32.totalorder %s38, %s39
      %p48 = scmp.eq.s32.totalorder %s21, 0
      %p49 = por %p47, %p48
      %p50 = scmp.ne.s32.totalorder %s38, %s39
      %p51 = scmp.eq.s32.totalorder %s22, 7
      %p52 = por %p50, %p51
      %p54 = scmp.ne.s32.totalorder %s39, %s53
      %p55 = scmp.eq.s32.totalorder %s22, 0
      %p56 = por %p54, %p55
      %s57 = ssub.s32 %s23, %s35
      %s58 = ssub.s32 %s24, %s31
      %s59 = sor.u32 %s57, %s58
      %p60 = scmp.eq.s32.totalorder %s59, 0
      %s62 = sadd.s32 %s61, 1
      %s63 = scalar_select %p60, %s61, %s62
      %p66 = pneg %p60
      %p67 = scmp.eq.s32.totalorder %s16, 7
      %p68 = por %p66, %p67
      %p69 = scmp.ne.s32.totalorder %s61, %s64
      %p70 = scmp.eq.s32.totalorder %s16, 0
      %p71 = por %p69, %p70
      %p72 = scmp.ne.s32.totalorder %s61, %s64
      %p73 = scmp.eq.s32.totalorder %s21, 7
      %p74 = por %p72, %p73
      %p75 = scmp.ne.s32.totalorder %s64, %s65
      %p76 = scmp.eq.s32.totalorder %s21, 0
      %p77 = por %p75, %p76
      %p78 = scmp.ne.s32.totalorder %s64, %s65
      %p79 = scmp.eq.s32.totalorder %s22, 7
      %p80 = por %p78, %p79
      %p82 = scmp.ne.s32.totalorder %s65, %s81
      %p83 = scmp.eq.s32.totalorder %s22, 0
      %p84 = por %p82, %p83
      %s86 = sadd.s32 %s85, 1
      %p89 = scmp.eq.s32.totalorder %s16, 7
      %p90 = scmp.ne.s32.totalorder %s85, %s87
      %p91 = scmp.eq.s32.totalorder %s16, 0
      %p92 = por %p90, %p91
      %p93 = scmp.ne.s32.totalorder %s85, %s87
      %p94 = scmp.eq.s32.totalorder %s21, 7
      %p95 = por %p93, %p94
      %p96 = scmp.ne.s32.totalorder %s87, %s88
      %p97 = scmp.eq.s32.totalorder %s21, 0
      %p98 = por %p96, %p97
      %p99 = scmp.ne.s32.totalorder %s87, %s88
      %p100 = scmp.eq.s32.totalorder %s22, 7
      %p101 = por %p99, %p100
      %p103 = scmp.ne.s32.totalorder %s88, %s102
      %p104 = scmp.eq.s32.totalorder %s22, 0
      %p105 = por %p103, %p104
      %s106 = ssub.s32 %s23, %s35
      %s107 = ssub.s32 %s24, %s31
      %s108 = sor.u32 %s106, %s107
      %p109 = scmp.eq.s32.totalorder %s108, 0
      %s111 = sadd.s32 %s110, 1
      %s112 = scalar_select %p109, %s110, %s111
      %p115 = pneg %p109
      %p116 = scmp.eq.s32.totalorder %s16, 7
      %p117 = por %p115, %p116
      %p118 = scmp.ne.s32.totalorder %s110, %s113
      %p119 = scmp.eq.s32.totalorder %s16, 0
      %p120 = por %p118, %p119
      %p121 = scmp.ne.s32.totalorder %s110, %s113
      %p122 = scmp.eq.s32.totalorder %s21, 7
      %p123 = por %p121, %p122
      %p124 = scmp.ne.s32.totalorder %s113, %s114
      %p125 = scmp.eq.s32.totalorder %s21, 0
      %p126 = por %p124, %p125
      %p127 = scmp.ne.s32.totalorder %s113, %s114
      %p128 = scmp.eq.s32.totalorder %s22, 7
      %p129 = por %p127, %p128
      %p131 = scmp.ne.s32.totalorder %s114, %s130
      %p132 = scmp.eq.s32.totalorder %s22, 0
      %p133 = por %p131, %p132
      %p134 = scmp.le.s32.totalorder 1, %s16
      %p135 = scmp.lt.s32.totalorder %s16, 9
      %p136 = pnand %p134, %p135
      %p137 = pneg %p136
      // Predicated region
      $region9: #{tpu_custom_call.1} parent=5 // pred_check
        _
      $region10: #{tpu_custom_call.1} parent=5 // pred_check_branch
        %139 = sbr.rel (%p136) target = $region12
      $region11: #{tpu_custom_call.1} parent=5 // pred_region
        %s140 = ssub.s32 %s16, 1
        // Predicated region
        $region13: #{tpu_custom_call.1} parent=11 // pred_check
          %p141 = pneg %p49
        $region14: #{tpu_custom_call.1} parent=11 // pred_check_branch
          %143 = sbr.rel (%p141) target = $region16
        $region15: #{tpu_custom_call.1} parent=11 // pred_region
          %s145 = ssub.s32 64, 64
          %146 = vsyncadd [#allocation3], %s145
          %s148 = sshll.u32 [#allocation2], 4
          %s149 = int_to_ptr.vmem [resolvable:$true] %s148
          %151 = dma.hbm_to_vmem [thread:$0]  %s0, 64, %s149, [#allocation3]
        $region16: #{tpu_custom_call.1} parent=11 // pred_fallthru
          _
        // Predicated region
        $region17: #{tpu_custom_call.1} parent=11 // pred_check
          %p152 = pneg %p98
        $region18: #{tpu_custom_call.1} parent=11 // pred_check_branch
          %154 = sbr.rel (%p152) target = $region20
        $region19: #{tpu_custom_call.1} parent=11 // pred_region
          _
        $region20: #{tpu_custom_call.1} parent=11 // pred_fallthru
          _
      $region12: #{tpu_custom_call.1} parent=5 // pred_fallthru
        _
      %p155 = scmp.lt.s32.totalorder %s16, 8
      // Predicated region
      $region21: #{tpu_custom_call.1} parent=5 // pred_check
        %p156 = pneg %p155
      $region22: #{tpu_custom_call.1} parent=5 // pred_check_branch
        %158 = sbr.rel (%p156) target = $region24
      $region23: #{tpu_custom_call.1} parent=5 // pred_region
        // Predicated region
        $region25: #{tpu_custom_call.1} parent=23 // pred_check
          %p159 = pneg %p71
        $region26: #{tpu_custom_call.1} parent=23 // pred_check_branch
          %161 = sbr.rel (%p159) target = $region28
        $region27: #{tpu_custom_call.1} parent=23 // pred_region
          %s162 = sand.u32 %s61, 1
          %s163 = scalar_lea.sflag [#allocation6], %s162
          %s164 = sand.u32 %s61, 1
          %s165 = smul.addr %s164, 768
          %s166 = scalar_lea.vmem [#allocation5], %s165
          %s167 = smul.u32 16, %s24
          %s169 = ssub.s32 12288, 12288
          %170 = vsyncadd %s163, %s169
          %s171 = smul.addr %s23, 1536
          %s172 = sadd.s32 %s167, %s171
          %s173 = smul.addr %s172, 64
          %s174 = scalar_lea.hbm %s1, %s173
          %s175 = sshll.u32 %s166, 4
          %s176 = int_to_ptr.vmem [resolvable:$true] %s175
          %181 = dma.hbm_to_vmem [thread:$0]  %s174, 12288, %s176, %s163, 8192, 1024, 64
        $region28: #{tpu_custom_call.1} parent=23 // pred_fallthru
          _
      $region24: #{tpu_custom_call.1} parent=5 // pred_fallthru
        _
      %p182 = scmp.le.s32.totalorder 1, %s16
      %p183 = scmp.lt.s32.totalorder %s16, 9
      %p184 = pnand %p182, %p183
      %p185 = pneg %p184
      // Predicated region
      $region29: #{tpu_custom_call.1} parent=5 // pred_check
        _
      $region30: #{tpu_custom_call.1} parent=5 // pred_check_branch
        %187 = sbr.rel (%p184) target = $region32
      $region31: #{tpu_custom_call.1} parent=5 // pred_region
        %s188 = ssub.s32 %s16, 1
        // Predicated region
        $region33: #{tpu_custom_call.1} parent=31 // pred_check
          %p189 = pneg %p49
        $region34: #{tpu_custom_call.1} parent=31 // pred_check_branch
          %191 = sbr.rel (%p189) target = $region36
        $region35: #{tpu_custom_call.1} parent=31 // pred_region
          %192 = dma.done [#allocation3], 64
        $region36: #{tpu_custom_call.1} parent=31 // pred_fallthru
          _
        %s193 = sand.u32 %s64, 1
        %s194 = scalar_lea.sflag [#allocation6], %s193
        %s195 = sand.u32 %s64, 1
        %s196 = smul.addr %s195, 768
        %s197 = scalar_lea.vmem [#allocation5], %s196
        // Predicated region
        $region37: #{tpu_custom_call.1} parent=31 // pred_check
          %p198 = pneg %p77
        $region38: #{tpu_custom_call.1} parent=31 // pred_check_branch
          %200 = sbr.rel (%p198) target = $region40
        $region39: #{tpu_custom_call.1} parent=31 // pred_region
          %201 = dma.done %s194, 12288
        $region40: #{tpu_custom_call.1} parent=31 // pred_fallthru
          _
        %p202 = pneg %p49
        %p203 = pneg %p46
        %s204 = sand.u32 %s64, 1
        %s205 = scalar_lea.sflag [#allocation6], %s204
        %s206 = sand.u32 %s64, 1
        %s207 = smul.addr %s206, 768
        %s208 = scalar_lea.vmem [#allocation5], %s207
        %p209 = pneg %p77
        %p210 = pneg %p74
        %p211 = pneg %p98
        %p212 = pneg %p95
        %p213 = pneg %p126
        %p214 = pneg %p123
        %s215 = sand.u32 %s113, 1
        %s216 = scalar_lea.sflag [#allocation4], %s215
        %s217 = sand.u32 %s113, 1
        %s218 = smul.addr %s217, 128
        %s219 = scalar_lea.vmem [#allocation7], %s218
        %s220 = smul.u32 16, %s26
        %s221 = smul.u32 16, %s26
        %v223 = vld [vmem:[#allocation2] sm:$0xf]
        %v224 = vld [vmem:[%s197] sm:$0xff]
        %v225 = vld [vmem:[%s197 + $0x8] sm:$0xff]
        %v226 = vld [vmem:[%s197 + $0x10] sm:$0xff]
        %v227 = vld [vmem:[%s197 + $0x18] sm:$0xff]
        %v228 = vld [vmem:[%s197 + $0x20] sm:$0xff]
        %v229 = vld [vmem:[%s197 + $0x28] sm:$0xff]
        %v230 = vld [vmem:[%s197 + $0x30] sm:$0xff]
        %v231 = vld [vmem:[%s197 + $0x38] sm:$0xff]
        %v232 = vld [vmem:[%s197 + $0x40] sm:$0xff]
        %v233 = vld [vmem:[%s197 + $0x48] sm:$0xff]
        %v234 = vld [vmem:[%s197 + $0x50] sm:$0xff]
        %v235 = vld [vmem:[%s197 + $0x58] sm:$0xff]
        %v236 = vld [vmem:[%s197 + $0x60] sm:$0xff]
        %v237 = vld [vmem:[%s197 + $0x68] sm:$0xff]
        %v238 = vld [vmem:[%s197 + $0x70] sm:$0xff]
        %v239 = vld [vmem:[%s197 + $0x78] sm:$0xff]
        %v240 = vld [vmem:[%s197 + $0x80] sm:$0xff]
        %v241 = vld [vmem:[%s197 + $0x88] sm:$0xff]
        %v242 = vld [vmem:[%s197 + $0x90] sm:$0xff]
        %v243 = vld [vmem:[%s197 + $0x98] sm:$0xff]
        %v244 = vld [vmem:[%s197 + $0xa0] sm:$0xff]
        %v245 = vld [vmem:[%s197 + $0xa8] sm:$0xff]
        %v246 = vld [vmem:[%s197 + $0xb0] sm:$0xff]
        %v247 = vld [vmem:[%s197 + $0xb8] sm:$0xff]
        %v248 = vld [vmem:[%s197 + $0xc0] sm:$0xff]
        %v249 = vld [vmem:[%s197 + $0xc8] sm:$0xff]
        %v250 = vld [vmem:[%s197 + $0xd0] sm:$0xff]
        %v251 = vld [vmem:[%s197 + $0xd8] sm:$0xff]
        %v252 = vld [vmem:[%s197 + $0xe0] sm:$0xff]
        %v253 = vld [vmem:[%s197 + $0xe8] sm:$0xff]
        %v254 = vld [vmem:[%s197 + $0xf0] sm:$0xff]
        %v255 = vld [vmem:[%s197 + $0xf8] sm:$0xff]
        %v256 = vld [vmem:[%s197 + $0x100] sm:$0xff]
        %v257 = vld [vmem:[%s197 + $0x108] sm:$0xff]
        %v258 = vld [vmem:[%s197 + $0x110] sm:$0xff]
        %v259 = vld [vmem:[%s197 + $0x118] sm:$0xff]
        %v260 = vld [vmem:[%s197 + $0x120] sm:$0xff]
        %v261 = vld [vmem:[%s197 + $0x128] sm:$0xff]
        %v262 = vld [vmem:[%s197 + $0x130] sm:$0xff]
        %v263 = vld [vmem:[%s197 + $0x138] sm:$0xff]
        %v264 = vld [vmem:[%s197 + $0x140] sm:$0xff]
        %v265 = vld [vmem:[%s197 + $0x148] sm:$0xff]
        %v266 = vld [vmem:[%s197 + $0x150] sm:$0xff]
        %v267 = vld [vmem:[%s197 + $0x158] sm:$0xff]
        %v268 = vld [vmem:[%s197 + $0x160] sm:$0xff]
        %v269 = vld [vmem:[%s197 + $0x168] sm:$0xff]
        %v270 = vld [vmem:[%s197 + $0x170] sm:$0xff]
        %v271 = vld [vmem:[%s197 + $0x178] sm:$0xff]
        %v272 = vld [vmem:[%s197 + $0x180] sm:$0xff]
        %v273 = vld [vmem:[%s197 + $0x188] sm:$0xff]
        %v274 = vld [vmem:[%s197 + $0x190] sm:$0xff]
        %v275 = vld [vmem:[%s197 + $0x198] sm:$0xff]
        %v276 = vld [vmem:[%s197 + $0x1a0] sm:$0xff]
        %v277 = vld [vmem:[%s197 + $0x1a8] sm:$0xff]
        %v278 = vld [vmem:[%s197 + $0x1b0] sm:$0xff]
        %v279 = vld [vmem:[%s197 + $0x1b8] sm:$0xff]
        %v280 = vld [vmem:[%s197 + $0x1c0] sm:$0xff]
        %v281 = vld [vmem:[%s197 + $0x1c8] sm:$0xff]
        %v282 = vld [vmem:[%s197 + $0x1d0] sm:$0xff]
        %v283 = vld [vmem:[%s197 + $0x1d8] sm:$0xff]
        %v284 = vld [vmem:[%s197 + $0x1e0] sm:$0xff]
        %v285 = vld [vmem:[%s197 + $0x1e8] sm:$0xff]
        %v286 = vld [vmem:[%s197 + $0x1f0] sm:$0xff]
        %v287 = vld [vmem:[%s197 + $0x1f8] sm:$0xff]
        %v288 = vld [vmem:[%s197 + $0x200] sm:$0xff]
        %v289 = vld [vmem:[%s197 + $0x208] sm:$0xff]
        %v290 = vld [vmem:[%s197 + $0x210] sm:$0xff]
        %v291 = vld [vmem:[%s197 + $0x218] sm:$0xff]
        %v292 = vld [vmem:[%s197 + $0x220] sm:$0xff]
        %v293 = vld [vmem:[%s197 + $0x228] sm:$0xff]
        %v294 = vld [vmem:[%s197 + $0x230] sm:$0xff]
        %v295 = vld [vmem:[%s197 + $0x238] sm:$0xff]
        %v296 = vld [vmem:[%s197 + $0x240] sm:$0xff]
        %v297 = vld [vmem:[%s197 + $0x248] sm:$0xff]
        %v298 = vld [vmem:[%s197 + $0x250] sm:$0xff]
        %v299 = vld [vmem:[%s197 + $0x258] sm:$0xff]
        %v300 = vld [vmem:[%s197 + $0x260] sm:$0xff]
        %v301 = vld [vmem:[%s197 + $0x268] sm:$0xff]
        %v302 = vld [vmem:[%s197 + $0x270] sm:$0xff]
        %v303 = vld [vmem:[%s197 + $0x278] sm:$0xff]
        %v304 = vld [vmem:[%s197 + $0x280] sm:$0xff]
        %v305 = vld [vmem:[%s197 + $0x288] sm:$0xff]
        %v306 = vld [vmem:[%s197 + $0x290] sm:$0xff]
        %v307 = vld [vmem:[%s197 + $0x298] sm:$0xff]
        %v308 = vld [vmem:[%s197 + $0x2a0] sm:$0xff]
        %v309 = vld [vmem:[%s197 + $0x2a8] sm:$0xff]
        %v310 = vld [vmem:[%s197 + $0x2b0] sm:$0xff]
        %v311 = vld [vmem:[%s197 + $0x2b8] sm:$0xff]
        %v312 = vld [vmem:[%s197 + $0x2c0] sm:$0xff]
        %v313 = vld [vmem:[%s197 + $0x2c8] sm:$0xff]
        %v314 = vld [vmem:[%s197 + $0x2d0] sm:$0xff]
        %v315 = vld [vmem:[%s197 + $0x2d8] sm:$0xff]
        %v316 = vld [vmem:[%s197 + $0x2e0] sm:$0xff]
        %v317 = vld [vmem:[%s197 + $0x2e8] sm:$0xff]
        %v318 = vld [vmem:[%s197 + $0x2f0] sm:$0xff]
        %v319 = vld [vmem:[%s197 + $0x2f8] sm:$0xff]
        %v320 = vld [vmem:[%s2] sm:$0xff]
        %322 = vset.pattern.permute.xlu0 0
        %323 = vperm.xlu0 %322, %v320
        %v324 = vpop.permute.xlu0 %323
        %v422 = vunpack.c.l.b16 %v224
        %v423 = vunpack.c.h.b16 %v224
        %v424 = vunpack.c.l.b16 %v225
        %v425 = vunpack.c.h.b16 %v225
        %v426 = vunpack.c.l.b16 %v226
        %v427 = vunpack.c.h.b16 %v226
        %v428 = vunpack.c.l.b16 %v227
        %v429 = vunpack.c.h.b16 %v227
        %v430 = vunpack.c.l.b16 %v228
        %v431 = vunpack.c.h.b16 %v228
        %v432 = vunpack.c.l.b16 %v229
        %v433 = vunpack.c.h.b16 %v229
        %v434 = vunpack.c.l.b16 %v230
        %v435 = vunpack.c.h.b16 %v230
        %v436 = vunpack.c.l.b16 %v231
        %v437 = vunpack.c.h.b16 %v231
        %v438 = vunpack.c.l.b16 %v232
        %v439 = vunpack.c.h.b16 %v232
        %v440 = vunpack.c.l.b16 %v233
        %v441 = vunpack.c.h.b16 %v233
        %v442 = vunpack.c.l.b16 %v234
        %v443 = vunpack.c.h.b16 %v234
        %v444 = vunpack.c.l.b16 %v235
        %v445 = vunpack.c.h.b16 %v235
        %v446 = vunpack.c.l.b16 %v236
        %v447 = vunpack.c.h.b16 %v236
        %v448 = vunpack.c.l.b16 %v237
        %v449 = vunpack.c.h.b16 %v237
        %v450 = vunpack.c.l.b16 %v238
        %v451 = vunpack.c.h.b16 %v238
        %v452 = vunpack.c.l.b16 %v239
        %v453 = vunpack.c.h.b16 %v239
        %v454 = vunpack.c.l.b16 %v240
        %v455 = vunpack.c.h.b16 %v240
        %v456 = vunpack.c.l.b16 %v241
        %v457 = vunpack.c.h.b16 %v241
        %v458 = vunpack.c.l.b16 %v242
        %v459 = vunpack.c.h.b16 %v242
        %v460 = vunpack.c.l.b16 %v243
        %v461 = vunpack.c.h.b16 %v243
        %v462 = vunpack.c.l.b16 %v244
        %v463 = vunpack.c.h.b16 %v244
        %v464 = vunpack.c.l.b16 %v245
        %v465 = vunpack.c.h.b16 %v245
        %v466 = vunpack.c.l.b16 %v246
        %v467 = vunpack.c.h.b16 %v246
        %v468 = vunpack.c.l.b16 %v247
        %v469 = vunpack.c.h.b16 %v247
        %v470 = vunpack.c.l.b16 %v248
        %v471 = vunpack.c.h.b16 %v248
        %v472 = vunpack.c.l.b16 %v249
        %v473 = vunpack.c.h.b16 %v249
        %v474 = vunpack.c.l.b16 %v250
        %v475 = vunpack.c.h.b16 %v250
        %v476 = vunpack.c.l.b16 %v251
        %v477 = vunpack.c.h.b16 %v251
        %v478 = vunpack.c.l.b16 %v252
        %v479 = vunpack.c.h.b16 %v252
        %v480 = vunpack.c.l.b16 %v253
        %v481 = vunpack.c.h.b16 %v253
        %v482 = vunpack.c.l.b16 %v254
        %v483 = vunpack.c.h.b16 %v254
        %v484 = vunpack.c.l.b16 %v255
        %v485 = vunpack.c.h.b16 %v255
        %v486 = vunpack.c.l.b16 %v256
        %v487 = vunpack.c.h.b16 %v256
        %v488 = vunpack.c.l.b16 %v257
        %v489 = vunpack.c.h.b16 %v257
        %v490 = vunpack.c.l.b16 %v258
        %v491 = vunpack.c.h.b16 %v258
        %v492 = vunpack.c.l.b16 %v259
        %v493 = vunpack.c.h.b16 %v259
        %v494 = vunpack.c.l.b16 %v260
        %v495 = vunpack.c.h.b16 %v260
        %v496 = vunpack.c.l.b16 %v261
        %v497 = vunpack.c.h.b16 %v261
        %v498 = vunpack.c.l.b16 %v262
        %v499 = vunpack.c.h.b16 %v262
        %v500 = vunpack.c.l.b16 %v263
        %v501 = vunpack.c.h.b16 %v263
        %v502 = vunpack.c.l.b16 %v264
        %v503 = vunpack.c.h.b16 %v264
        %v504 = vunpack.c.l.b16 %v265
        %v505 = vunpack.c.h.b16 %v265
        %v506 = vunpack.c.l.b16 %v266
        %v507 = vunpack.c.h.b16 %v266
        %v508 = vunpack.c.l.b16 %v267
        %v509 = vunpack.c.h.b16 %v267
        %v510 = vunpack.c.l.b16 %v268
        %v511 = vunpack.c.h.b16 %v268
        %v512 = vunpack.c.l.b16 %v269
        %v513 = vunpack.c.h.b16 %v269
        %v514 = vunpack.c.l.b16 %v270
        %v515 = vunpack.c.h.b16 %v270
        %v516 = vunpack.c.l.b16 %v271
        %v517 = vunpack.c.h.b16 %v271
        %v518 = vunpack.c.l.b16 %v272
        %v519 = vunpack.c.h.b16 %v272
        %v520 = vunpack.c.l.b16 %v273
        %v521 = vunpack.c.h.b16 %v273
        %v522 = vunpack.c.l.b16 %v274
        %v523 = vunpack.c.h.b16 %v274
        %v524 = vunpack.c.l.b16 %v275
        %v525 = vunpack.c.h.b16 %v275
        %v526 = vunpack.c.l.b16 %v276
        %v527 = vunpack.c.h.b16 %v276
        %v528 = vunpack.c.l.b16 %v277
        %v529 = vunpack.c.h.b16 %v277
        %v530 = vunpack.c.l.b16 %v278
        %v531 = vunpack.c.h.b16 %v278
        %v532 = vunpack.c.l.b16 %v279
        %v533 = vunpack.c.h.b16 %v279
        %v534 = vunpack.c.l.b16 %v280
        %v535 = vunpack.c.h.b16 %v280
        %v536 = vunpack.c.l.b16 %v281
        %v537 = vunpack.c.h.b16 %v281
        %v538 = vunpack.c.l.b16 %v282
        %v539 = vunpack.c.h.b16 %v282
        %v540 = vunpack.c.l.b16 %v283
        %v541 = vunpack.c.h.b16 %v283
        %v542 = vunpack.c.l.b16 %v284
        %v543 = vunpack.c.h.b16 %v284
        %v544 = vunpack.c.l.b16 %v285
        %v545 = vunpack.c.h.b16 %v285
        %v546 = vunpack.c.l.b16 %v286
        %v547 = vunpack.c.h.b16 %v286
        %v548 = vunpack.c.l.b16 %v287
        %v549 = vunpack.c.h.b16 %v287
        %v550 = vunpack.c.l.b16 %v288
        %v551 = vunpack.c.h.b16 %v288
        %v552 = vunpack.c.l.b16 %v289
        %v553 = vunpack.c.h.b16 %v289
        %v554 = vunpack.c.l.b16 %v290
        %v555 = vunpack.c.h.b16 %v290
        %v556 = vunpack.c.l.b16 %v291
        %v557 = vunpack.c.h.b16 %v291
        %v558 = vunpack.c.l.b16 %v292
        %v559 = vunpack.c.h.b16 %v292
        %v560 = vunpack.c.l.b16 %v293
        %v561 = vunpack.c.h.b16 %v293
        %v562 = vunpack.c.l.b16 %v294
        %v563 = vunpack.c.h.b16 %v294
        %v564 = vunpack.c.l.b16 %v295
        %v565 = vunpack.c.h.b16 %v295
        %v566 = vunpack.c.l.b16 %v296
        %v567 = vunpack.c.h.b16 %v296
        %v568 = vunpack.c.l.b16 %v297
        %v569 = vunpack.c.h.b16 %v297
        %v570 = vunpack.c.l.b16 %v298
        %v571 = vunpack.c.h.b16 %v298
        %v572 = vunpack.c.l.b16 %v299
        %v573 = vunpack.c.h.b16 %v299
        %v574 = vunpack.c.l.b16 %v300
        %v575 = vunpack.c.h.b16 %v300
        %v576 = vunpack.c.l.b16 %v301
        %v577 = vunpack.c.h.b16 %v301
        %v578 = vunpack.c.l.b16 %v302
        %v579 = vunpack.c.h.b16 %v302
        %v580 = vunpack.c.l.b16 %v303
        %v581 = vunpack.c.h.b16 %v303
        %v582 = vunpack.c.l.b16 %v304
        %v583 = vunpack.c.h.b16 %v304
        %v584 = vunpack.c.l.b16 %v305
        %v585 = vunpack.c.h.b16 %v305
        %v586 = vunpack.c.l.b16 %v306
        %v587 = vunpack.c.h.b16 %v306
        %v588 = vunpack.c.l.b16 %v307
        %v589 = vunpack.c.h.b16 %v307
        %v590 = vunpack.c.l.b16 %v308
        %v591 = vunpack.c.h.b16 %v308
        %v592 = vunpack.c.l.b16 %v309
        %v593 = vunpack.c.h.b16 %v309
        %v594 = vunpack.c.l.b16 %v310
        %v595 = vunpack.c.h.b16 %v310
        %v596 = vunpack.c.l.b16 %v311
        %v597 = vunpack.c.h.b16 %v311
        %v598 = vunpack.c.l.b16 %v312
        %v599 = vunpack.c.h.b16 %v312
        %v600 = vunpack.c.l.b16 %v313
        %v601 = vunpack.c.h.b16 %v313
        %v602 = vunpack.c.l.b16 %v314
        %v603 = vunpack.c.h.b16 %v314
        %v604 = vunpack.c.l.b16 %v315
        %v605 = vunpack.c.h.b16 %v315
        %v606 = vunpack.c.l.b16 %v316
        %v607 = vunpack.c.h.b16 %v316
        %v608 = vunpack.c.l.b16 %v317
        %v609 = vunpack.c.h.b16 %v317
        %v610 = vunpack.c.l.b16 %v318
        %v611 = vunpack.c.h.b16 %v318
        %v612 = vunpack.c.l.b16 %v319
        %v613 = vunpack.c.h.b16 %v319
        %v614 = vpack.c.b16 %v438, %v422
        %v615 = vpack.c.b16 %v439, %v423
        %v616 = vpack.c.b16 %v440, %v424
        %v617 = vpack.c.b16 %v441, %v425
        %v618 = vpack.c.b16 %v442, %v426
        %v619 = vpack.c.b16 %v443, %v427
        %v620 = vpack.c.b16 %v444, %v428
        %v621 = vpack.c.b16 %v445, %v429
        %v622 = vpack.c.b16 %v446, %v430
        %v623 = vpack.c.b16 %v447, %v431
        %v624 = vpack.c.b16 %v448, %v432
        %v625 = vpack.c.b16 %v449, %v433
        %v626 = vpack.c.b16 %v450, %v434
        %v627 = vpack.c.b16 %v451, %v435
        %v628 = vpack.c.b16 %v452, %v436
        %v629 = vpack.c.b16 %v453, %v437
        %v630 = vpack.c.b16 %v470, %v454
        %v631 = vpack.c.b16 %v471, %v455
        %v632 = vpack.c.b16 %v472, %v456
        %v633 = vpack.c.b16 %v473, %v457
        %v634 = vpack.c.b16 %v474, %v458
        %v635 = vpack.c.b16 %v475, %v459
        %v636 = vpack.c.b16 %v476, %v460
        %v637 = vpack.c.b16 %v477, %v461
        %v638 = vpack.c.b16 %v478, %v462
        %v639 = vpack.c.b16 %v479, %v463
        %v640 = vpack.c.b16 %v480, %v464
        %v641 = vpack.c.b16 %v481, %v465
        %v642 = vpack.c.b16 %v482, %v466
        %v643 = vpack.c.b16 %v483, %v467
        %v644 = vpack.c.b16 %v484, %v468
        %v645 = vpack.c.b16 %v485, %v469
        %v646 = vpack.c.b16 %v502, %v486
        %v647 = vpack.c.b16 %v503, %v487
        %v648 = vpack.c.b16 %v504, %v488
        %v649 = vpack.c.b16 %v505, %v489
        %v650 = vpack.c.b16 %v506, %v490
        %v651 = vpack.c.b16 %v507, %v491
        %v652 = vpack.c.b16 %v508, %v492
        %v653 = vpack.c.b16 %v509, %v493
        %v654 = vpack.c.b16 %v510, %v494
        %v655 = vpack.c.b16 %v511, %v495
        %v656 = vpack.c.b16 %v512, %v496
        %v657 = vpack.c.b16 %v513, %v497
        %v658 = vpack.c.b16 %v514, %v498
        %v659 = vpack.c.b16 %v515, %v499
        %v660 = vpack.c.b16 %v516, %v500
        %v661 = vpack.c.b16 %v517, %v501
        %v662 = vpack.c.b16 %v534, %v518
        %v663 = vpack.c.b16 %v535, %v519
        %v664 = vpack.c.b16 %v536, %v520
        %v665 = vpack.c.b16 %v537, %v521
        %v666 = vpack.c.b16 %v538, %v522
        %v667 = vpack.c.b16 %v539, %v523
        %v668 = vpack.c.b16 %v540, %v524
        %v669 = vpack.c.b16 %v541, %v525
        %v670 = vpack.c.b16 %v542, %v526
        %v671 = vpack.c.b16 %v543, %v527
        %v672 = vpack.c.b16 %v544, %v528
        %v673 = vpack.c.b16 %v545, %v529
        %v674 = vpack.c.b16 %v546, %v530
        %v675 = vpack.c.b16 %v547, %v531
        %v676 = vpack.c.b16 %v548, %v532
        %v677 = vpack.c.b16 %v549, %v533
        %v678 = vpack.c.b16 %v566, %v550
        %v679 = vpack.c.b16 %v567, %v551
        %v680 = vpack.c.b16 %v568, %v552
        %v681 = vpack.c.b16 %v569, %v553
        %v682 = vpack.c.b16 %v570, %v554
        %v683 = vpack.c.b16 %v571, %v555
        %v684 = vpack.c.b16 %v572, %v556
        %v685 = vpack.c.b16 %v573, %v557
        %v686 = vpack.c.b16 %v574, %v558
        %v687 = vpack.c.b16 %v575, %v559
        %v688 = vpack.c.b16 %v576, %v560
        %v689 = vpack.c.b16 %v577, %v561
        %v690 = vpack.c.b16 %v578, %v562
        %v691 = vpack.c.b16 %v579, %v563
        %v692 = vpack.c.b16 %v580, %v564
        %v693 = vpack.c.b16 %v581, %v565
        %v694 = vpack.c.b16 %v598, %v582
        %v695 = vpack.c.b16 %v599, %v583
        %v696 = vpack.c.b16 %v600, %v584
        %v697 = vpack.c.b16 %v601, %v585
        %v698 = vpack.c.b16 %v602, %v586
        %v699 = vpack.c.b16 %v603, %v587
        %v700 = vpack.c.b16 %v604, %v588
        %v701 = vpack.c.b16 %v605, %v589
        %v702 = vpack.c.b16 %v606, %v590
        %v703 = vpack.c.b16 %v607, %v591
        %v704 = vpack.c.b16 %v608, %v592
        %v705 = vpack.c.b16 %v609, %v593
        %v706 = vpack.c.b16 %v610, %v594
        %v707 = vpack.c.b16 %v611, %v595
        %v708 = vpack.c.b16 %v612, %v596
        %v709 = vpack.c.b16 %v613, %v597
        %vm806 = vcmask 785408
        %v808 = vsel %vm806, %v223, 0
        %810 = vmatprep.subr.bf16.mxu0 %v615
        %811 = vmatpush1.bf16.msra.mxu0 %v614
        %812 = vmatprep.subr.bf16.mxu0 %v631
        %813 = vmatpush1.bf16.msra.mxu0 %v630
        %814 = vmatprep.subr.bf16.mxu0 %v647
        %815 = vmatpush1.bf16.msra.mxu0 %v646
        %816 = vmatprep.subr.bf16.mxu0 %v663
        %817 = vmatpush1.bf16.msra.mxu0 %v662
        %818 = vmatprep.subr.bf16.mxu0 %v679
        %819 = vmatpush1.bf16.msra.mxu0 %v678
        %820 = vmatprep.subr.bf16.mxu0 %v695
        %821 = vmatpush1.bf16.msra.mxu0 %v694
        %822 = vmatprep.subr.bf16.mxu0 0
        %823 = vmatpush1.bf16.msra.mxu0 0
        %824 = vmatprep.subr.bf16.mxu0 0
        %825 = vmatpush1.bf16.msra.mxu0 0
        %826 = vmatprep.subr.bf16.mxu0 0
        %827 = vmatpush1.bf16.msra.mxu0 0
        %828 = vmatprep.subr.bf16.mxu0 0
        %829 = vmatpush1.bf16.msra.mxu0 0
        %830 = vmatprep.subr.bf16.mxu0 0
        %831 = vmatpush1.bf16.msra.mxu0 0
        %832 = vmatprep.subr.bf16.mxu0 0
        %833 = vmatpush1.bf16.msra.mxu0 0
        %834 = vmatprep.subr.bf16.mxu0 0
        %835 = vmatpush1.bf16.msra.mxu0 0
        %836 = vmatprep.subr.bf16.mxu0 0
        %837 = vmatpush1.bf16.msra.mxu0 0
        %838 = vmatprep.subr.bf16.mxu0 0
        %839 = vmatpush1.bf16.msra.mxu0 0
        %840 = vmatprep.subr.bf16.mxu0 0
        %841 = vmatpush1.bf16.msra.mxu0 0
        %842 = vmatprep.mubr.bf16.mxu0 0
        %843 = vmatmul.mubr.bf16.gmra.mrb[0].mxu0 %v808
        %v844 = vpop.f32.mrb[0].mxu0
        %v845 = vadd.f32 %v324, %v844
        %v846 = vpop.f32.mrb[0].mxu0
        %v847 = vadd.f32 %v324, %v846
        %v848 = vpop.f32.mrb[0].mxu0
        %v849 = vpop.f32.mrb[0].mxu0
        %850 = vdwg.mxu0
        %851 = vmatprep.subr.bf16.mxu0 %v617
        %852 = vmatpush1.bf16.msra.mxu0 %v616
        %853 = vmatprep.subr.bf16.mxu0 %v633
        %854 = vmatpush1.bf16.msra.mxu0 %v632
        %855 = vmatprep.subr.bf16.mxu0 %v649
        %856 = vmatpush1.bf16.msra.mxu0 %v648
        %857 = vmatprep.subr.bf16.mxu0 %v665
        %858 = vmatpush1.bf16.msra.mxu0 %v664
        %859 = vmatprep.subr.bf16.mxu0 %v681
        %860 = vmatpush1.bf16.msra.mxu0 %v680
        %861 = vmatprep.subr.bf16.mxu0 %v697
        %862 = vmatpush1.bf16.msra.mxu0 %v696
        %863 = vmatprep.subr.bf16.mxu0 0
        %864 = vmatpush1.bf16.msra.mxu0 0
        %865 = vmatprep.subr.bf16.mxu0 0
        %866 = vmatpush1.bf16.msra.mxu0 0
        %867 = vmatprep.subr.bf16.mxu0 0
        %868 = vmatpush1.bf16.msra.mxu0 0
        %869 = vmatprep.subr.bf16.mxu0 0
        %870 = vmatpush1.bf16.msra.mxu0 0
        %871 = vmatprep.subr.bf16.mxu0 0
        %872 = vmatpush1.bf16.msra.mxu0 0
        %873 = vmatprep.subr.bf16.mxu0 0
        %874 = vmatpush1.bf16.msra.mxu0 0
        %875 = vmatprep.subr.bf16.mxu0 0
        %876 = vmatpush1.bf16.msra.mxu0 0
        %877 = vmatprep.subr.bf16.mxu0 0
        %878 = vmatpush1.bf16.msra.mxu0 0
        %879 = vmatprep.subr.bf16.mxu0 0
        %880 = vmatpush1.bf16.msra.mxu0 0
        %881 = vmatprep.subr.bf16.mxu0 0
        %882 = vmatpush1.bf16.msra.mxu0 0
        %883 = vmatprep.mubr.bf16.mxu0 0
        %884 = vmatmul.mubr.bf16.gmra.mrb[0].mxu0 %v808
        %v885 = vpop.f32.mrb[0].mxu0
        %v886 = vadd.f32 %v324, %v885
        %v887 = vpop.f32.mrb[0].mxu0
        %v888 = vadd.f32 %v324, %v887
        %v889 = vpop.f32.mrb[0].mxu0
        %v890 = vpop.f32.mrb[0].mxu0
        %891 = vdwg.mxu0
        %892 = vmatprep.subr.bf16.mxu0 %v619
        %893 = vmatpush1.bf16.msra.mxu0 %v618
        %894 = vmatprep.subr.bf16.mxu0 %v635
        %895 = vmatpush1.bf16.msra.mxu0 %v634
        %896 = vmatprep.subr.bf16.mxu0 %v651
        %897 = vmatpush1.bf16.msra.mxu0 %v650
        %898 = vmatprep.subr.bf16.mxu0 %v667
        %899 = vmatpush1.bf16.msra.mxu0 %v666
        %900 = vmatprep.subr.bf16.mxu0 %v683
        %901 = vmatpush1.bf16.msra.mxu0 %v682
        %902 = vmatprep.subr.bf16.mxu0 %v699
        %903 = vmatpush1.bf16.msra.mxu0 %v698
        %904 = vmatprep.subr.bf16.mxu0 0
        %905 = vmatpush1.bf16.msra.mxu0 0
        %906 = vmatprep.subr.bf16.mxu0 0
        %907 = vmatpush1.bf16.msra.mxu0 0
        %908 = vmatprep.subr.bf16.mxu0 0
        %909 = vmatpush1.bf16.msra.mxu0 0
        %910 = vmatprep.subr.bf16.mxu0 0
        %911 = vmatpush1.bf16.msra.mxu0 0
        %912 = vmatprep.subr.bf16.mxu0 0
        %913 = vmatpush1.bf16.msra.mxu0 0
        %914 = vmatprep.subr.bf16.mxu0 0
        %915 = vmatpush1.bf16.msra.mxu0 0
        %916 = vmatprep.subr.bf16.mxu0 0
        %917 = vmatpush1.bf16.msra.mxu0 0
        %918 = vmatprep.subr.bf16.mxu0 0
        %919 = vmatpush1.bf16.msra.mxu0 0
        %920 = vmatprep.subr.bf16.mxu0 0
        %921 = vmatpush1.bf16.msra.mxu0 0
        %922 = vmatprep.subr.bf16.mxu0 0
        %923 = vmatpush1.bf16.msra.mxu0 0
        %924 = vmatprep.mubr.bf16.mxu0 0
        %925 = vmatmul.mubr.bf16.gmra.mrb[0].mxu0 %v808
        %v926 = vpop.f32.mrb[0].mxu0
        %v927 = vadd.f32 %v324, %v926
        %v928 = vpop.f32.mrb[0].mxu0
        %v929 = vadd.f32 %v324, %v928
        %v930 = vpop.f32.mrb[0].mxu0
        %v931 = vpop.f32.mrb[0].mxu0
        %932 = vdwg.mxu0
        %933 = vmatprep.subr.bf16.mxu0 %v621
        %934 = vmatpush1.bf16.msra.mxu0 %v620
        %935 = vmatprep.subr.bf16.mxu0 %v637
        %936 = vmatpush1.bf16.msra.mxu0 %v636
        %937 = vmatprep.subr.bf16.mxu0 %v653
        %938 = vmatpush1.bf16.msra.mxu0 %v652
        %939 = vmatprep.subr.bf16.mxu0 %v669
        %940 = vmatpush1.bf16.msra.mxu0 %v668
        %941 = vmatprep.subr.bf16.mxu0 %v685
        %942 = vmatpush1.bf16.msra.mxu0 %v684
        %943 = vmatprep.subr.bf16.mxu0 %v701
        %944 = vmatpush1.bf16.msra.mxu0 %v700
        %945 = vmatprep.subr.bf16.mxu0 0
        %946 = vmatpush1.bf16.msra.mxu0 0
        %947 = vmatprep.subr.bf16.mxu0 0
        %948 = vmatpush1.bf16.msra.mxu0 0
        %949 = vmatprep.subr.bf16.mxu0 0
        %950 = vmatpush1.bf16.msra.mxu0 0
        %951 = vmatprep.subr.bf16.mxu0 0
        %952 = vmatpush1.bf16.msra.mxu0 0
        %953 = vmatprep.subr.bf16.mxu0 0
        %954 = vmatpush1.bf16.msra.mxu0 0
        %955 = vmatprep.subr.bf16.mxu0 0
        %956 = vmatpush1.bf16.msra.mxu0 0
        %957 = vmatprep.subr.bf16.mxu0 0
        %958 = vmatpush1.bf16.msra.mxu0 0
        %959 = vmatprep.subr.bf16.mxu0 0
        %960 = vmatpush1.bf16.msra.mxu0 0
        %961 = vmatprep.subr.bf16.mxu0 0
        %962 = vmatpush1.bf16.msra.mxu0 0
        %963 = vmatprep.subr.bf16.mxu0 0
        %964 = vmatpush1.bf16.msra.mxu0 0
        %965 = vmatprep.mubr.bf16.mxu0 0
        %966 = vmatmul.mubr.bf16.gmra.mrb[0].mxu0 %v808
        %v967 = vpop.f32.mrb[0].mxu0
        %v968 = vadd.f32 %v324, %v967
        %v969 = vpop.f32.mrb[0].mxu0
        %v970 = vadd.f32 %v324, %v969
        %v971 = vpop.f32.mrb[0].mxu0
        %v972 = vpop.f32.mrb[0].mxu0
        %973 = vdwg.mxu0
        %974 = vmatprep.subr.bf16.mxu0 %v623
        %975 = vmatpush1.bf16.msra.mxu0 %v622
        %976 = vmatprep.subr.bf16.mxu0 %v639
        %977 = vmatpush1.bf16.msra.mxu0 %v638
        %978 = vmatprep.subr.bf16.mxu0 %v655
        %979 = vmatpush1.bf16.msra.mxu0 %v654
        %980 = vmatprep.subr.bf16.mxu0 %v671
        %981 = vmatpush1.bf16.msra.mxu0 %v670
        %982 = vmatprep.subr.bf16.mxu0 %v687
        %983 = vmatpush1.bf16.msra.mxu0 %v686
        %984 = vmatprep.subr.bf16.mxu0 %v703
        %985 = vmatpush1.bf16.msra.mxu0 %v702
        %986 = vmatprep.subr.bf16.mxu0 0
        %987 = vmatpush1.bf16.msra.mxu0 0
        %988 = vmatprep.subr.bf16.mxu0 0
        %989 = vmatpush1.bf16.msra.mxu0 0
        %990 = vmatprep.subr.bf16.mxu0 0
        %991 = vmatpush1.bf16.msra.mxu0 0
        %992 = vmatprep.subr.bf16.mxu0 0
        %993 = vmatpush1.bf16.msra.mxu0 0
        %994 = vmatprep.subr.bf16.mxu0 0
        %995 = vmatpush1.bf16.msra.mxu0 0
        %996 = vmatprep.subr.bf16.mxu0 0
        %997 = vmatpush1.bf16.msra.mxu0 0
        %998 = vmatprep.subr.bf16.mxu0 0
        %999 = vmatpush1.bf16.msra.mxu0 0
        %1000 = vmatprep.subr.bf16.mxu0 0
        %1001 = vmatpush1.bf16.msra.mxu0 0
        %1002 = vmatprep.subr.bf16.mxu0 0
        %1003 = vmatpush1.bf16.msra.mxu0 0
        %1004 = vmatprep.subr.bf16.mxu0 0
        %1005 = vmatpush1.bf16.msra.mxu0 0
        %1006 = vmatprep.mubr.bf16.mxu0 0
        %1007 = vmatmul.mubr.bf16.gmra.mrb[0].mxu0 %v808
        %v1008 = vpop.f32.mrb[0].mxu0
        %v1009 = vadd.f32 %v324, %v1008
        %v1010 = vpop.f32.mrb[0].mxu0
        %v1011 = vadd.f32 %v324, %v1010
        %v1012 = vpop.f32.mrb[0].mxu0
        %v1013 = vpop.f32.mrb[0].mxu0
        %1014 = vdwg.mxu0
        %1015 = vmatprep.subr.bf16.mxu0 %v625
        %1016 = vmatpush1.bf16.msra.mxu0 %v624
        %1017 = vmatprep.subr.bf16.mxu0 %v641
        %1018 = vmatpush1.bf16.msra.mxu0 %v640
        %1019 = vmatprep.subr.bf16.mxu0 %v657
        %1020 = vmatpush1.bf16.msra.mxu0 %v656
        %1021 = vmatprep.subr.bf16.mxu0 %v673
        %1022 = vmatpush1.bf16.msra.mxu0 %v672
        %1023 = vmatprep.subr.bf16.mxu0 %v689
        %1024 = vmatpush1.bf16.msra.mxu0 %v688
        %1025 = vmatprep.subr.bf16.mxu0 %v705
        %1026 = vmatpush1.bf16.msra.mxu0 %v704
        %1027 = vmatprep.subr.bf16.mxu0 0
        %1028 = vmatpush1.bf16.msra.mxu0 0
        %1029 = vmatprep.subr.bf16.mxu0 0
        %1030 = vmatpush1.bf16.msra.mxu0 0
        %1031 = vmatprep.subr.bf16.mxu0 0
        %1032 = vmatpush1.bf16.msra.mxu0 0
        %1033 = vmatprep.subr.bf16.mxu0 0
        %1034 = vmatpush1.bf16.msra.mxu0 0
        %1035 = vmatprep.subr.bf16.mxu0 0
        %1036 = vmatpush1.bf16.msra.mxu0 0
        %1037 = vmatprep.subr.bf16.mxu0 0
        %1038 = vmatpush1.bf16.msra.mxu0 0
        %1039 = vmatprep.subr.bf16.mxu0 0
        %1040 = vmatpush1.bf16.msra.mxu0 0
        %1041 = vmatprep.subr.bf16.mxu0 0
        %1042 = vmatpush1.bf16.msra.mxu0 0
        %1043 = vmatprep.subr.bf16.mxu0 0
        %1044 = vmatpush1.bf16.msra.mxu0 0
        %1045 = vmatprep.subr.bf16.mxu0 0
        %1046 = vmatpush1.bf16.msra.mxu0 0
        %1047 = vmatprep.mubr.bf16.mxu0 0
        %1048 = vmatmul.mubr.bf16.gmra.mrb[0].mxu0 %v808
        %v1049 = vpop.f32.mrb[0].mxu0
        %v1050 = vadd.f32 %v324, %v1049
        %v1051 = vpop.f32.mrb[0].mxu0
        %v1052 = vadd.f32 %v324, %v1051
        %v1053 = vpop.f32.mrb[0].mxu0
        %v1054 = vpop.f32.mrb[0].mxu0
        %1055 = vdwg.mxu0
        %1056 = vmatprep.subr.bf16.mxu0 %v627
        %1057 = vmatpush1.bf16.msra.mxu0 %v626
        %1058 = vmatprep.subr.bf16.mxu0 %v643
        %1059 = vmatpush1.bf16.msra.mxu0 %v642
        %1060 = vmatprep.subr.bf16.mxu0 %v659
        %1061 = vmatpush1.bf16.msra.mxu0 %v658
        %1062 = vmatprep.subr.bf16.mxu0 %v675
        %1063 = vmatpush1.bf16.msra.mxu0 %v674
        %1064 = vmatprep.subr.bf16.mxu0 %v691
        %1065 = vmatpush1.bf16.msra.mxu0 %v690
        %1066 = vmatprep.subr.bf16.mxu0 %v707
        %1067 = vmatpush1.bf16.msra.mxu0 %v706
        %1068 = vmatprep.subr.bf16.mxu0 0
        %1069 = vmatpush1.bf16.msra.mxu0 0
        %1070 = vmatprep.subr.bf16.mxu0 0
        %1071 = vmatpush1.bf16.msra.mxu0 0
        %1072 = vmatprep.subr.bf16.mxu0 0
        %1073 = vmatpush1.bf16.msra.mxu0 0
        %1074 = vmatprep.subr.bf16.mxu0 0
        %1075 = vmatpush1.bf16.msra.mxu0 0
        %1076 = vmatprep.subr.bf16.mxu0 0
        %1077 = vmatpush1.bf16.msra.mxu0 0
        %1078 = vmatprep.subr.bf16.mxu0 0
        %1079 = vmatpush1.bf16.msra.mxu0 0
        %1080 = vmatprep.subr.bf16.mxu0 0
        %1081 = vmatpush1.bf16.msra.mxu0 0
        %1082 = vmatprep.subr.bf16.mxu0 0
        %1083 = vmatpush1.bf16.msra.mxu0 0
        %1084 = vmatprep.subr.bf16.mxu0 0
        %1085 = vmatpush1.bf16.msra.mxu0 0
        %1086 = vmatprep.subr.bf16.mxu0 0
        %1087 = vmatpush1.bf16.msra.mxu0 0
        %1088 = vmatprep.mubr.bf16.mxu0 0
        %1089 = vmatmul.mubr.bf16.gmra.mrb[0].mxu0 %v808
        %v1090 = vpop.f32.mrb[0].mxu0
        %v1091 = vadd.f32 %v324, %v1090
        %v1092 = vpop.f32.mrb[0].mxu0
        %v1093 = vadd.f32 %v324, %v1092
        %v1094 = vpop.f32.mrb[0].mxu0
        %v1095 = vpop.f32.mrb[0].mxu0
        %1096 = vdwg.mxu0
        %1097 = vmatprep.subr.bf16.mxu0 %v629
        %1098 = vmatpush1.bf16.msra.mxu0 %v628
        %1099 = vmatprep.subr.bf16.mxu0 %v645
        %1100 = vmatpush1.bf16.msra.mxu0 %v644
        %1101 = vmatprep.subr.bf16.mxu0 %v661
        %1102 = vmatpush1.bf16.msra.mxu0 %v660
        %1103 = vmatprep.subr.bf16.mxu0 %v677
        %1104 = vmatpush1.bf16.msra.mxu0 %v676
        %1105 = vmatprep.subr.bf16.mxu0 %v693
        %1106 = vmatpush1.bf16.msra.mxu0 %v692
        %1107 = vmatprep.subr.bf16.mxu0 %v709
        %1108 = vmatpush1.bf16.msra.mxu0 %v708
        %1109 = vmatprep.subr.bf16.mxu0 0
        %1110 = vmatpush1.bf16.msra.mxu0 0
        %1111 = vmatprep.subr.bf16.mxu0 0
        %1112 = vmatpush1.bf16.msra.mxu0 0
        %1113 = vmatprep.subr.bf16.mxu0 0
        %1114 = vmatpush1.bf16.msra.mxu0 0
        %1115 = vmatprep.subr.bf16.mxu0 0
        %1116 = vmatpush1.bf16.msra.mxu0 0
        %1117 = vmatprep.subr.bf16.mxu0 0
        %1118 = vmatpush1.bf16.msra.mxu0 0
        %1119 = vmatprep.subr.bf16.mxu0 0
        %1120 = vmatpush1.bf16.msra.mxu0 0
        %1121 = vmatprep.subr.bf16.mxu0 0
        %1122 = vmatpush1.bf16.msra.mxu0 0
        %1123 = vmatprep.subr.bf16.mxu0 0
        %1124 = vmatpush1.bf16.msra.mxu0 0
        %1125 = vmatprep.subr.bf16.mxu0 0
        %1126 = vmatpush1.bf16.msra.mxu0 0
        %1127 = vmatprep.subr.bf16.mxu0 0
        %1128 = vmatpush1.bf16.msra.mxu0 0
        %1129 = vmatprep.mubr.bf16.mxu0 0
        %1130 = vmatmul.mubr.bf16.gmra.mrb[0].mxu0 %v808
        %v1131 = vpop.f32.mrb[0].mxu0
        %v1132 = vadd.f32 %v324, %v1131
        %v1133 = vpop.f32.mrb[0].mxu0
        %v1134 = vadd.f32 %v324, %v1133
        %v1135 = vpop.f32.mrb[0].mxu0
        %v1136 = vpop.f32.mrb[0].mxu0
        %1137 = vdwg.mxu0
        %1138 = vst [vmem:[%s219] sm:$0xff] %v845
        %1139 = vst [vmem:[%s219 + $0x8] sm:$0xff] %v847
        %1140 = vst [vmem:[%s219 + $0x10] sm:$0xff] %v886
        %1141 = vst [vmem:[%s219 + $0x18] sm:$0xff] %v888
        %1142 = vst [vmem:[%s219 + $0x20] sm:$0xff] %v927
        %1143 = vst [vmem:[%s219 + $0x28] sm:$0xff] %v929
        %1144 = vst [vmem:[%s219 + $0x30] sm:$0xff] %v968
        %1145 = vst [vmem:[%s219 + $0x38] sm:$0xff] %v970
        %1146 = vst [vmem:[%s219 + $0x40] sm:$0xff] %v1009
        %1147 = vst [vmem:[%s219 + $0x48] sm:$0xff] %v1011
        %1148 = vst [vmem:[%s219 + $0x50] sm:$0xff] %v1050
        %1149 = vst [vmem:[%s219 + $0x58] sm:$0xff] %v1052
        %1150 = vst [vmem:[%s219 + $0x60] sm:$0xff] %v1091
        %1151 = vst [vmem:[%s219 + $0x68] sm:$0xff] %v1093
        %1152 = vst [vmem:[%s219 + $0x70] sm:$0xff] %v1132
        %1153 = vst [vmem:[%s219 + $0x78] sm:$0xff] %v1134
        %s1154 = sand.u32 %s113, 1
        %s1155 = scalar_lea.sflag [#allocation4], %s1154
        %s1156 = sand.u32 %s113, 1
        %s1157 = smul.addr %s1156, 128
        %s1158 = scalar_lea.vmem [#allocation7], %s1157
        // Predicated region
        $region41: #{tpu_custom_call.1} parent=31 // pred_check
          %p1159 = pneg %p123
        $region42: #{tpu_custom_call.1} parent=31 // pred_check_branch
          %1161 = sbr.rel (%p1159) target = $region44
        $region43: #{tpu_custom_call.1} parent=31 // pred_region
          %s1162 = smul.u32 16, %s26
          %s1164 = ssub.s32 2048, 2048
          %1165 = vsyncadd %s1155, %s1164
          %s1166 = smul.addr %s25, 128
          %s1167 = sadd.s32 %s1162, %s1166
          %s1168 = smul.addr %s1167, 128
          %s1169 = scalar_lea.hbm %s3, %s1168
          %s1171 = sshll.u32 %s1158, 4
          %s1172 = int_to_ptr.vmem [resolvable:$true] %s1171
          %1174 = dma.vmem_to_hbm [thread:$0]  %s1172, 2048, %s1169, %s1155
        $region44: #{tpu_custom_call.1} parent=31 // pred_fallthru
          _
      $region32: #{tpu_custom_call.1} parent=5 // pred_fallthru
        _
      %p1175 = scmp.le.s32.totalorder 2, %s16
      // Predicated region
      $region45: #{tpu_custom_call.1} parent=5 // pred_check
        %p1176 = pneg %p1175
      $region46: #{tpu_custom_call.1} parent=5 // pred_check_branch
        %1178 = sbr.rel (%p1176) target = $region48
      $region47: #{tpu_custom_call.1} parent=5 // pred_region
        %s1179 = ssub.s32 %s16, 2
        // Predicated region
        $region49: #{tpu_custom_call.1} parent=47 // pred_check
          %p1180 = pneg %p129
        $region50: #{tpu_custom_call.1} parent=47 // pred_check_branch
          %1182 = sbr.rel (%p1180) target = $region52
        $region51: #{tpu_custom_call.1} parent=47 // pred_region
          %s1183 = sand.u32 %s114, 1
          %s1184 = scalar_lea.sflag [#allocation4], %s1183
          %s1185 = sand.u32 %s114, 1
          %s1186 = smul.addr %s1185, 128
          %s1187 = scalar_lea.vmem [#allocation7], %s1186
          %1188 = dma.done %s1184, 2048
        $region52: #{tpu_custom_call.1} parent=47 // pred_fallthru
          _
      $region48: #{tpu_custom_call.1} parent=5 // pred_fallthru
        _
    $region6: #{tpu_custom_call.1} parent=1 // loop_footer
      %s20 = sadd.s32 1, %s16
    $region7: #{tpu_custom_call.1} parent=1 // loop_footer_branch
      %15 = sbr.rel target = $region3
    $region8: #{tpu_custom_call.1} parent=1 // loop_exit
      _
    %1189 = vsyncpa [#allocation3], 1
    %s1190 = scalar_lea.sflag [#allocation3], 1
    %1191 = vsyncpa %s1190, 1
    %1192 = vsyncpa [#allocation6], 1
    %s1193 = scalar_lea.sflag [#allocation6], 1
    %1194 = vsyncpa %s1193, 1
    %1195 = vsyncpa [#allocation4], 1
    %s1196 = scalar_lea.sflag [#allocation4], 1
    %1197 = vsyncpa %s1196, 1

</llo_original>
